<compile_context>
chip_gen: v5e
topology: v5e:2x2
jax: 0.10.0
libtpu: 0.0.40
codegen_flags: <defaults>
</compile_context>

<pallas_src>
import functools

import jax
import jax.numpy as jnp
from jax.experimental import pallas as pl
from jax.experimental.pallas import tpu as pltpu

HIDDEN = 128
PROJ = 64
TEMPERATURE = 0.07


# --------------------------------- kernel ----------------------------------

def _contrastive_kernel(inv_temperature, inv_batch, d_pad,
                        h_ref, w_ref, out_ref):
    # Packed weight slab row layout (per modality), all offsets static:
    #   [0            : d_pad        ]  W1  (d_in rows real, rest zero)
    #   [d_pad        : d_pad+128    ]  W2  (cols 64:128 zero)
    #   [d_pad+128    : d_pad+136    ]  b1 in row 0 of this 8-row block
    #   [d_pad+136    : d_pad+144    ]  b2 (lanes 64:128 zero) in row 0
    row_w2 = d_pad
    row_b1 = d_pad + HIDDEN
    row_b2 = d_pad + HIDDEN + 8

    def project(m):
        x = h_ref[m]                                     # (B, d_pad)
        wm = w_ref.at[m]                                 # (R, 128) ref view, free
        w1 = wm[pl.ds(0, d_pad), :]                      # (d_pad, 128)
        w2 = wm[pl.ds(row_w2, HIDDEN), :]                # (128, 128)
        b1 = wm[pl.ds(row_b1, 1), :]                     # (1, 128)
        b2 = wm[pl.ds(row_b2, 1), :]                     # (1, 128)

        h1 = jnp.dot(x, w1, preferred_element_type=jnp.float32) + b1
        h1 = jnp.maximum(h1, 0.0)
        z = jnp.dot(h1, w2, preferred_element_type=jnp.float32) + b2
        # z lanes [64:128] are exactly zero (zero W2 cols / b2 lanes), so all
        # reductions below over 128 lanes equal the 64-lane reductions.
        sumsq = jnp.sum(z * z, axis=1, keepdims=True)
        # matches F.normalize(eps=1e-12): clamp ||z||^2 at eps^2, rsqrt + mul.
        return z * jax.lax.rsqrt(jnp.maximum(sumsq, 1e-24))

    z_l = project(0)
    z_a = project(1)
    z_v = project(2)

    def infonce(z1, z2):
        # sim = (z1 @ z2.T) / T without an explicit transpose: contract last dims.
        sim = jax.lax.dot_general(
            z1, z2, (((1,), (1,)), ((), ())),
            preferred_element_type=jnp.float32) * inv_temperature
        # diag(z1 @ z2.T) == row-wise dot(z1, z2); no iota / where needed.
        pos = jnp.sum(z1 * z2, axis=1, keepdims=True) * inv_temperature   # (B, 1)
        m = jnp.max(sim, axis=1, keepdims=True)
        lse = m + jnp.log(jnp.sum(jnp.exp(sim - m), axis=1, keepdims=True))
        return -jnp.sum(pos - lse) * inv_batch

    total = infonce(z_l, z_a) + infonce(z_l, z_v) + infonce(z_a, z_v)

    # TODO(synk): original PyTorch calls `nn.Tanh(loss * 0.1)` — a module
    # constructor (a bug that raises at runtime); we implement the evident
    # intent: tanh(loss * 0.1).
    loss = jnp.tanh(total * 0.1)

    b = z_l.shape[0]
    loss_block = jnp.zeros((b, HIDDEN), jnp.float32) + loss
    # Single unmasked lane-dense (B, 4*128 = 512) store -> one write-back DMA;
    # every piece is exactly one vreg wide, so the concat is pure placement.
    out_ref[...] = jnp.concatenate([z_l, z_a, z_v, loss_block], axis=1)


# -------------------------------- wrapper ----------------------------------

def _round_up(x, m):
    return ((x + m - 1) // m) * m


def pack_weights(params, d_pad):
    """One-time packing of all weights/biases into a single (3, d_pad+144, 128)
    slab. Call once at init; do NOT rebuild per forward."""
    def pack_one(w1, b1, w2, b2):
        w1p = jnp.pad(w1, ((0, d_pad - w1.shape[0]), (0, 0)))              # (d_pad, 128)
        w2p = jnp.pad(w2, ((0, 0), (0, HIDDEN - w2.shape[1])))             # (128, 128)
        b1p = jnp.pad(b1.reshape(1, HIDDEN), ((0, 7), (0, 0)))             # (8, 128)
        b2p = jnp.pad(b2.reshape(1, PROJ), ((0, 7), (0, HIDDEN - PROJ)))   # (8, 128)
        return jnp.concatenate([w1p, w2p, b1p, b2p], axis=0)

    slab = jnp.stack([
        pack_one(params["w1l"], params["b1l"], params["w2l"], params["b2l"]),
        pack_one(params["w1a"], params["b1a"], params["w2a"], params["b2a"]),
        pack_one(params["w1v"], params["b1v"], params["w2v"], params["b2v"]),
    ])
    return slab                                                            # (3, d_pad+144, 128)


@functools.partial(jax.jit, static_argnames=("d_pad", "temperature"))
def contrastive_forward(w_slab, h_l, h_a, h_v, *, d_pad, temperature=TEMPERATURE):
    """Whole forward under one jit: H packing, gridless pallas_call, slices."""
    B = h_l.shape[0]

    def pad_h(x):
        return jnp.pad(x, ((0, 0), (0, d_pad - x.shape[1])))

    # Per-call activations slab (zero padding is exact for x @ W).
    H = jnp.stack([pad_h(h_l), pad_h(h_a), pad_h(h_v)])                    # (3, B, d_pad)

    out_shape = jax.ShapeDtypeStruct((B, 4 * HIDDEN), jnp.float32)
    vmem_spec = pl.BlockSpec(memory_space=pltpu.MemorySpace.VMEM)

    out = pl.pallas_call(
        functools.partial(_contrastive_kernel, 1.0 / temperature, 1.0 / B, d_pad),
        out_shape=out_shape,
        in_specs=[vmem_spec, vmem_spec],
        out_specs=vmem_spec,
    )(H, w_slab)

    z_l = out[:, 0 * HIDDEN:0 * HIDDEN + PROJ]
    z_a = out[:, 1 * HIDDEN:1 * HIDDEN + PROJ]
    z_v = out[:, 2 * HIDDEN:2 * HIDDEN + PROJ]
    loss = out[0, 3 * HIDDEN]
    return loss, (z_l, z_a, z_v)


# ---------------------------- parameter set-up -----------------------------

def init_params(key, d_l, d_a, d_v):
    """Deterministic init mimicking nn.Linear's U(-1/sqrt(fan_in), +1/sqrt(fan_in)).

    Weights are stored transposed vs. PyTorch, i.e. (in_features, out_features).
    """
    def linear(k, fan_in, fan_out):
        kw, kb = jax.random.split(k)
        bound = 1.0 / jnp.sqrt(fan_in)
        w = jax.random.uniform(kw, (fan_in, fan_out), jnp.float32, -bound, bound)
        b = jax.random.uniform(kb, (1, fan_out), jnp.float32, -bound, bound)
        return w, b

    keys = jax.random.split(key, 6)
    params = {}
    params["w1l"], params["b1l"] = linear(keys[0], d_l, HIDDEN)
    params["w2l"], params["b2l"] = linear(keys[1], HIDDEN, PROJ)
    params["w1a"], params["b1a"] = linear(keys[2], d_a, HIDDEN)
    params["w2a"], params["b2a"] = linear(keys[3], HIDDEN, PROJ)
    params["w1v"], params["b1v"] = linear(keys[4], d_v, HIDDEN)
    params["w2v"], params["b2v"] = linear(keys[5], HIDDEN, PROJ)
    return params


# ------------------------------ pure-JAX ref -------------------------------

def reference_forward(params, h_l, h_a, h_v, temperature=TEMPERATURE):
    def proj(x, w1, b1, w2, b2):
        h = jnp.maximum(jnp.dot(x, w1, precision="highest") + b1, 0.0)
        z = jnp.dot(h, w2, precision="highest") + b2
        return z / jnp.maximum(jnp.linalg.norm(z, axis=1, keepdims=True), 1e-12)

    def mi(z1, z2):
        sim = jnp.dot(z1, z2.T, precision="highest") / temperature
        pos = jnp.diag(sim)
        return -jnp.mean(pos - jax.scipy.special.logsumexp(sim, axis=1))

    z_l = proj(h_l, params["w1l"], params["b1l"], params["w2l"], params["b2l"])
    z_a = proj(h_a, params["w1a"], params["b1a"], params["w2a"], params["b2a"])
    z_v = proj(h_v, params["w1v"], params["b1v"], params["w2v"], params["b2v"])
    total = mi(z_l, z_a) + mi(z_l, z_v) + mi(z_a, z_v)
    return jnp.tanh(total * 0.1), (z_l, z_a, z_v)


# ---------------------------------- main -----------------------------------

if __name__ == "__main__":
    B, d_l, d_a, d_v = 8, 16, 20, 24

    key = jax.random.PRNGKey(0)
    k_param, k_l, k_a, k_v = jax.random.split(key, 4)
    params = init_params(k_param, d_l, d_a, d_v)

    # Contraction-dim padding is free on the MXU up to 128; never pad beyond.
    d_pad = max(HIDDEN, _round_up(max(d_l, d_a, d_v), 8))
    w_slab = jax.block_until_ready(pack_weights(params, d_pad))   # packed ONCE

    h_l = jax.random.normal(k_l, (B, d_l), jnp.float32)
    h_a = jax.random.normal(k_a, (B, d_a), jnp.float32)
    h_v = jax.random.normal(k_v, (B, d_v), jnp.float32)

    loss, (z_l, z_a, z_v) = contrastive_forward(w_slab, h_l, h_a, h_v, d_pad=d_pad)
    jax.block_until_ready((loss, z_l, z_a, z_v))

    ref_loss, (rzl, rza, rzv) = reference_forward(params, h_l, h_a, h_v)
    assert jnp.allclose(loss, ref_loss, atol=2e-5, rtol=2e-5)
    assert jnp.allclose(z_l, rzl, atol=2e-5, rtol=2e-5)
    assert jnp.allclose(z_a, rza, atol=2e-5, rtol=2e-5)
    assert jnp.allclose(z_v, rzv, atol=2e-5, rtol=2e-5)

    print("KERNEL_OK")
</pallas_src>

<mosaic_0001>
module attributes {stable_mosaic.version = 11 : i64} {
  func.func @_contrastive_kernel(%arg0: memref<3x8x128xf32, #tpu.memory_space<vmem>>, %arg1: memref<3x272x128xf32, #tpu.memory_space<vmem>>, %arg2: memref<8x512xf32, #tpu.memory_space<vmem>>) attributes {dimension_semantics = [], scalar_prefetch = 0 : i64, scratch_operands = 0 : i64, tpu.core_type = #tpu.core_type<tc>} {
    %c0 = arith.constant 0 : index
    %c0_0 = arith.constant 0 : index
    %c0_1 = arith.constant 0 : index
    %0 = vector.load %arg0[%c0, %c0_0, %c0_1] : memref<3x8x128xf32, #tpu.memory_space<vmem>>, vector<1x8x128xf32>
    %1 = vector.shape_cast %0 : vector<1x8x128xf32> to vector<8x128xf32>
    %c0_i32 = arith.constant 0 : i32
    %c0_i32_2 = arith.constant 0 : i32
    %c0_i32_3 = arith.constant 0 : i32
    %2 = tpu.memref_slice %arg1[%c0_i32, %c0_i32_2, %c0_i32_3] : memref<3x272x128xf32, #tpu.memory_space<vmem>> -> memref<1x272x128xf32, #tpu.memory_space<vmem>>
    %3 = tpu.memref_squeeze %2 : memref<1x272x128xf32, #tpu.memory_space<vmem>> -> memref<272x128xf32, #tpu.memory_space<vmem>>
    %c0_4 = arith.constant 0 : index
    %c0_5 = arith.constant 0 : index
    %4 = vector.load %3[%c0_4, %c0_5] : memref<272x128xf32, #tpu.memory_space<vmem>>, vector<128x128xf32>
    %c0_i32_6 = arith.constant 0 : i32
    %c0_i32_7 = arith.constant 0 : i32
    %c0_i32_8 = arith.constant 0 : i32
    %5 = tpu.memref_slice %arg1[%c0_i32_6, %c0_i32_7, %c0_i32_8] : memref<3x272x128xf32, #tpu.memory_space<vmem>> -> memref<1x272x128xf32, #tpu.memory_space<vmem>>
    %6 = tpu.memref_squeeze %5 : memref<1x272x128xf32, #tpu.memory_space<vmem>> -> memref<272x128xf32, #tpu.memory_space<vmem>>
    %c128 = arith.constant 128 : index
    %c0_9 = arith.constant 0 : index
    %7 = vector.load %6[%c128, %c0_9] : memref<272x128xf32, #tpu.memory_space<vmem>>, vector<128x128xf32>
    %c0_i32_10 = arith.constant 0 : i32
    %c0_i32_11 = arith.constant 0 : i32
    %c0_i32_12 = arith.constant 0 : i32
    %8 = tpu.memref_slice %arg1[%c0_i32_10, %c0_i32_11, %c0_i32_12] : memref<3x272x128xf32, #tpu.memory_space<vmem>> -> memref<1x272x128xf32, #tpu.memory_space<vmem>>
    %9 = tpu.memref_squeeze %8 : memref<1x272x128xf32, #tpu.memory_space<vmem>> -> memref<272x128xf32, #tpu.memory_space<vmem>>
    %c256 = arith.constant 256 : index
    %c0_13 = arith.constant 0 : index
    %10 = vector.load %9[%c256, %c0_13] : memref<272x128xf32, #tpu.memory_space<vmem>>, vector<1x128xf32>
    %c0_i32_14 = arith.constant 0 : i32
    %c0_i32_15 = arith.constant 0 : i32
    %c0_i32_16 = arith.constant 0 : i32
    %11 = tpu.memref_slice %arg1[%c0_i32_14, %c0_i32_15, %c0_i32_16] : memref<3x272x128xf32, #tpu.memory_space<vmem>> -> memref<1x272x128xf32, #tpu.memory_space<vmem>>
    %12 = tpu.memref_squeeze %11 : memref<1x272x128xf32, #tpu.memory_space<vmem>> -> memref<272x128xf32, #tpu.memory_space<vmem>>
    %c264 = arith.constant 264 : index
    %c0_17 = arith.constant 0 : index
    %13 = vector.load %12[%c264, %c0_17] : memref<272x128xf32, #tpu.memory_space<vmem>>, vector<1x128xf32>
    %cst = arith.constant dense<0.000000e+00> : vector<8x128xf32>
    %14 = tpu.matmul %1, %4, %cst {dimension_numbers = #tpu.dot_dimension_numbers<[1], [0], [0], [1], [0, 0, 1, 1], [], []>} : vector<8x128xf32>, vector<128x128xf32>, vector<8x128xf32> -> vector<8x128xf32>
    %15 = vector.broadcast %10 : vector<1x128xf32> to vector<8x128xf32>
    %16 = arith.addf %14, %15 : vector<8x128xf32>
    %cst_18 = arith.constant 0.000000e+00 : f32
    %17 = vector.broadcast %cst_18 : f32 to vector<8x128xf32>
    %18 = arith.maximumf %16, %17 : vector<8x128xf32>
    %cst_19 = arith.constant dense<0.000000e+00> : vector<8x128xf32>
    %19 = tpu.matmul %18, %7, %cst_19 {dimension_numbers = #tpu.dot_dimension_numbers<[1], [0], [0], [1], [0, 0, 1, 1], [], []>} : vector<8x128xf32>, vector<128x128xf32>, vector<8x128xf32> -> vector<8x128xf32>
    %20 = vector.broadcast %13 : vector<1x128xf32> to vector<8x128xf32>
    %21 = arith.addf %19, %20 : vector<8x128xf32>
    %22 = arith.mulf %21, %21 : vector<8x128xf32>
    %cst_20 = arith.constant dense<0.000000e+00> : vector<8xf32>
    %23 = vector.multi_reduction <add>, %22, %cst_20 [1] : vector<8x128xf32> to vector<8xf32>
    %24 = vector.shape_cast %23 : vector<8xf32> to vector<8x1xf32>
    %cst_21 = arith.constant 1.000000e-24 : f32
    %25 = vector.broadcast %cst_21 : f32 to vector<8x1xf32>
    %26 = arith.maximumf %24, %25 : vector<8x1xf32>
    %27 = math.rsqrt %26 : vector<8x1xf32>
    %28 = vector.broadcast %27 : vector<8x1xf32> to vector<8x128xf32>
    %29 = arith.mulf %21, %28 : vector<8x128xf32>
    %c1 = arith.constant 1 : index
    %c0_22 = arith.constant 0 : index
    %c0_23 = arith.constant 0 : index
    %30 = vector.load %arg0[%c1, %c0_22, %c0_23] : memref<3x8x128xf32, #tpu.memory_space<vmem>>, vector<1x8x128xf32>
    %31 = vector.shape_cast %30 : vector<1x8x128xf32> to vector<8x128xf32>
    %c1_i32 = arith.constant 1 : i32
    %c0_i32_24 = arith.constant 0 : i32
    %c0_i32_25 = arith.constant 0 : i32
    %32 = tpu.memref_slice %arg1[%c1_i32, %c0_i32_24, %c0_i32_25] : memref<3x272x128xf32, #tpu.memory_space<vmem>> -> memref<1x272x128xf32, #tpu.memory_space<vmem>>
    %33 = tpu.memref_squeeze %32 : memref<1x272x128xf32, #tpu.memory_space<vmem>> -> memref<272x128xf32, #tpu.memory_space<vmem>>
    %c0_26 = arith.constant 0 : index
    %c0_27 = arith.constant 0 : index
    %34 = vector.load %33[%c0_26, %c0_27] : memref<272x128xf32, #tpu.memory_space<vmem>>, vector<128x128xf32>
    %c1_i32_28 = arith.constant 1 : i32
    %c0_i32_29 = arith.constant 0 : i32
    %c0_i32_30 = arith.constant 0 : i32
    %35 = tpu.memref_slice %arg1[%c1_i32_28, %c0_i32_29, %c0_i32_30] : memref<3x272x128xf32, #tpu.memory_space<vmem>> -> memref<1x272x128xf32, #tpu.memory_space<vmem>>
    %36 = tpu.memref_squeeze %35 : memref<1x272x128xf32, #tpu.memory_space<vmem>> -> memref<272x128xf32, #tpu.memory_space<vmem>>
    %c128_31 = arith.constant 128 : index
    %c0_32 = arith.constant 0 : index
    %37 = vector.load %36[%c128_31, %c0_32] : memref<272x128xf32, #tpu.memory_space<vmem>>, vector<128x128xf32>
    %c1_i32_33 = arith.constant 1 : i32
    %c0_i32_34 = arith.constant 0 : i32
    %c0_i32_35 = arith.constant 0 : i32
    %38 = tpu.memref_slice %arg1[%c1_i32_33, %c0_i32_34, %c0_i32_35] : memref<3x272x128xf32, #tpu.memory_space<vmem>> -> memref<1x272x128xf32, #tpu.memory_space<vmem>>
    %39 = tpu.memref_squeeze %38 : memref<1x272x128xf32, #tpu.memory_space<vmem>> -> memref<272x128xf32, #tpu.memory_space<vmem>>
    %c256_36 = arith.constant 256 : index
    %c0_37 = arith.constant 0 : index
    %40 = vector.load %39[%c256_36, %c0_37] : memref<272x128xf32, #tpu.memory_space<vmem>>, vector<1x128xf32>
    %c1_i32_38 = arith.constant 1 : i32
    %c0_i32_39 = arith.constant 0 : i32
    %c0_i32_40 = arith.constant 0 : i32
    %41 = tpu.memref_slice %arg1[%c1_i32_38, %c0_i32_39, %c0_i32_40] : memref<3x272x128xf32, #tpu.memory_space<vmem>> -> memref<1x272x128xf32, #tpu.memory_space<vmem>>
    %42 = tpu.memref_squeeze %41 : memref<1x272x128xf32, #tpu.memory_space<vmem>> -> memref<272x128xf32, #tpu.memory_space<vmem>>
    %c264_41 = arith.constant 264 : index
    %c0_42 = arith.constant 0 : index
    %43 = vector.load %42[%c264_41, %c0_42] : memref<272x128xf32, #tpu.memory_space<vmem>>, vector<1x128xf32>
    %cst_43 = arith.constant dense<0.000000e+00> : vector<8x128xf32>
    %44 = tpu.matmul %31, %34, %cst_43 {dimension_numbers = #tpu.dot_dimension_numbers<[1], [0], [0], [1], [0, 0, 1, 1], [], []>} : vector<8x128xf32>, vector<128x128xf32>, vector<8x128xf32> -> vector<8x128xf32>
    %45 = vector.broadcast %40 : vector<1x128xf32> to vector<8x128xf32>
    %46 = arith.addf %44, %45 : vector<8x128xf32>
    %cst_44 = arith.constant 0.000000e+00 : f32
    %47 = vector.broadcast %cst_44 : f32 to vector<8x128xf32>
    %48 = arith.maximumf %46, %47 : vector<8x128xf32>
    %cst_45 = arith.constant dense<0.000000e+00> : vector<8x128xf32>
    %49 = tpu.matmul %48, %37, %cst_45 {dimension_numbers = #tpu.dot_dimension_numbers<[1], [0], [0], [1], [0, 0, 1, 1], [], []>} : vector<8x128xf32>, vector<128x128xf32>, vector<8x128xf32> -> vector<8x128xf32>
    %50 = vector.broadcast %43 : vector<1x128xf32> to vector<8x128xf32>
    %51 = arith.addf %49, %50 : vector<8x128xf32>
    %52 = arith.mulf %51, %51 : vector<8x128xf32>
    %cst_46 = arith.constant dense<0.000000e+00> : vector<8xf32>
    %53 = vector.multi_reduction <add>, %52, %cst_46 [1] : vector<8x128xf32> to vector<8xf32>
    %54 = vector.shape_cast %53 : vector<8xf32> to vector<8x1xf32>
    %cst_47 = arith.constant 1.000000e-24 : f32
    %55 = vector.broadcast %cst_47 : f32 to vector<8x1xf32>
    %56 = arith.maximumf %54, %55 : vector<8x1xf32>
    %57 = math.rsqrt %56 : vector<8x1xf32>
    %58 = vector.broadcast %57 : vector<8x1xf32> to vector<8x128xf32>
    %59 = arith.mulf %51, %58 : vector<8x128xf32>
    %c2 = arith.constant 2 : index
    %c0_48 = arith.constant 0 : index
    %c0_49 = arith.constant 0 : index
    %60 = vector.load %arg0[%c2, %c0_48, %c0_49] : memref<3x8x128xf32, #tpu.memory_space<vmem>>, vector<1x8x128xf32>
    %61 = vector.shape_cast %60 : vector<1x8x128xf32> to vector<8x128xf32>
    %c2_i32 = arith.constant 2 : i32
    %c0_i32_50 = arith.constant 0 : i32
    %c0_i32_51 = arith.constant 0 : i32
    %62 = tpu.memref_slice %arg1[%c2_i32, %c0_i32_50, %c0_i32_51] : memref<3x272x128xf32, #tpu.memory_space<vmem>> -> memref<1x272x128xf32, #tpu.memory_space<vmem>>
    %63 = tpu.memref_squeeze %62 : memref<1x272x128xf32, #tpu.memory_space<vmem>> -> memref<272x128xf32, #tpu.memory_space<vmem>>
    %c0_52 = arith.constant 0 : index
    %c0_53 = arith.constant 0 : index
    %64 = vector.load %63[%c0_52, %c0_53] : memref<272x128xf32, #tpu.memory_space<vmem>>, vector<128x128xf32>
    %c2_i32_54 = arith.constant 2 : i32
    %c0_i32_55 = arith.constant 0 : i32
    %c0_i32_56 = arith.constant 0 : i32
    %65 = tpu.memref_slice %arg1[%c2_i32_54, %c0_i32_55, %c0_i32_56] : memref<3x272x128xf32, #tpu.memory_space<vmem>> -> memref<1x272x128xf32, #tpu.memory_space<vmem>>
    %66 = tpu.memref_squeeze %65 : memref<1x272x128xf32, #tpu.memory_space<vmem>> -> memref<272x128xf32, #tpu.memory_space<vmem>>
    %c128_57 = arith.constant 128 : index
    %c0_58 = arith.constant 0 : index
    %67 = vector.load %66[%c128_57, %c0_58] : memref<272x128xf32, #tpu.memory_space<vmem>>, vector<128x128xf32>
    %c2_i32_59 = arith.constant 2 : i32
    %c0_i32_60 = arith.constant 0 : i32
    %c0_i32_61 = arith.constant 0 : i32
    %68 = tpu.memref_slice %arg1[%c2_i32_59, %c0_i32_60, %c0_i32_61] : memref<3x272x128xf32, #tpu.memory_space<vmem>> -> memref<1x272x128xf32, #tpu.memory_space<vmem>>
    %69 = tpu.memref_squeeze %68 : memref<1x272x128xf32, #tpu.memory_space<vmem>> -> memref<272x128xf32, #tpu.memory_space<vmem>>
    %c256_62 = arith.constant 256 : index
    %c0_63 = arith.constant 0 : index
    %70 = vector.load %69[%c256_62, %c0_63] : memref<272x128xf32, #tpu.memory_space<vmem>>, vector<1x128xf32>
    %c2_i32_64 = arith.constant 2 : i32
    %c0_i32_65 = arith.constant 0 : i32
    %c0_i32_66 = arith.constant 0 : i32
    %71 = tpu.memref_slice %arg1[%c2_i32_64, %c0_i32_65, %c0_i32_66] : memref<3x272x128xf32, #tpu.memory_space<vmem>> -> memref<1x272x128xf32, #tpu.memory_space<vmem>>
    %72 = tpu.memref_squeeze %71 : memref<1x272x128xf32, #tpu.memory_space<vmem>> -> memref<272x128xf32, #tpu.memory_space<vmem>>
    %c264_67 = arith.constant 264 : index
    %c0_68 = arith.constant 0 : index
    %73 = vector.load %72[%c264_67, %c0_68] : memref<272x128xf32, #tpu.memory_space<vmem>>, vector<1x128xf32>
    %cst_69 = arith.constant dense<0.000000e+00> : vector<8x128xf32>
    %74 = tpu.matmul %61, %64, %cst_69 {dimension_numbers = #tpu.dot_dimension_numbers<[1], [0], [0], [1], [0, 0, 1, 1], [], []>} : vector<8x128xf32>, vector<128x128xf32>, vector<8x128xf32> -> vector<8x128xf32>
    %75 = vector.broadcast %70 : vector<1x128xf32> to vector<8x128xf32>
    %76 = arith.addf %74, %75 : vector<8x128xf32>
    %cst_70 = arith.constant 0.000000e+00 : f32
    %77 = vector.broadcast %cst_70 : f32 to vector<8x128xf32>
    %78 = arith.maximumf %76, %77 : vector<8x128xf32>
    %cst_71 = arith.constant dense<0.000000e+00> : vector<8x128xf32>
    %79 = tpu.matmul %78, %67, %cst_71 {dimension_numbers = #tpu.dot_dimension_numbers<[1], [0], [0], [1], [0, 0, 1, 1], [], []>} : vector<8x128xf32>, vector<128x128xf32>, vector<8x128xf32> -> vector<8x128xf32>
    %80 = vector.broadcast %73 : vector<1x128xf32> to vector<8x128xf32>
    %81 = arith.addf %79, %80 : vector<8x128xf32>
    %82 = arith.mulf %81, %81 : vector<8x128xf32>
    %cst_72 = arith.constant dense<0.000000e+00> : vector<8xf32>
    %83 = vector.multi_reduction <add>, %82, %cst_72 [1] : vector<8x128xf32> to vector<8xf32>
    %84 = vector.shape_cast %83 : vector<8xf32> to vector<8x1xf32>
    %cst_73 = arith.constant 1.000000e-24 : f32
    %85 = vector.broadcast %cst_73 : f32 to vector<8x1xf32>
    %86 = arith.maximumf %84, %85 : vector<8x1xf32>
    %87 = math.rsqrt %86 : vector<8x1xf32>
    %88 = vector.broadcast %87 : vector<8x1xf32> to vector<8x128xf32>
    %89 = arith.mulf %81, %88 : vector<8x128xf32>
    %cst_74 = arith.constant dense<0.000000e+00> : vector<8x8xf32>
    %90 = tpu.matmul %29, %59, %cst_74 {dimension_numbers = #tpu.dot_dimension_numbers<[1], [1], [0], [0], [0, 0, 1, 0], [], []>} : vector<8x128xf32>, vector<8x128xf32>, vector<8x8xf32> -> vector<8x8xf32>
    %cst_75 = arith.constant 14.2857141 : f32
    %91 = vector.broadcast %cst_75 : f32 to vector<8x8xf32>
    %92 = arith.mulf %90, %91 : vector<8x8xf32>
    %93 = arith.mulf %29, %59 : vector<8x128xf32>
    %cst_76 = arith.constant dense<0.000000e+00> : vector<8xf32>
    %94 = vector.multi_reduction <add>, %93, %cst_76 [1] : vector<8x128xf32> to vector<8xf32>
    %95 = vector.shape_cast %94 : vector<8xf32> to vector<8x1xf32>
    %cst_77 = arith.constant 14.2857141 : f32
    %96 = vector.broadcast %cst_77 : f32 to vector<8x1xf32>
    %97 = arith.mulf %95, %96 : vector<8x1xf32>
    %cst_78 = arith.constant dense<0xFF800000> : vector<8xf32>
    %98 = vector.multi_reduction <maximumf>, %92, %cst_78 [1] : vector<8x8xf32> to vector<8xf32>
    %99 = vector.shape_cast %98 : vector<8xf32> to vector<8x1xf32>
    %100 = vector.broadcast %99 : vector<8x1xf32> to vector<8x8xf32>
    %101 = arith.subf %92, %100 : vector<8x8xf32>
    %102 = math.exp %101 : vector<8x8xf32>
    %cst_79 = arith.constant dense<0.000000e+00> : vector<8xf32>
    %103 = vector.multi_reduction <add>, %102, %cst_79 [1] : vector<8x8xf32> to vector<8xf32>
    %104 = vector.shape_cast %103 : vector<8xf32> to vector<8x1xf32>
    %105 = math.log %104 : vector<8x1xf32>
    %106 = arith.addf %99, %105 : vector<8x1xf32>
    %107 = arith.subf %97, %106 : vector<8x1xf32>
    %108 = vector.shape_cast %107 : vector<8x1xf32> to vector<1x8x1xf32>
    %cst_80 = arith.constant dense<0.000000e+00> : vector<1xf32>
    %109 = vector.multi_reduction <add>, %108, %cst_80 [1, 2] : vector<1x8x1xf32> to vector<1xf32>
    %110 = vector.shape_cast %109 : vector<1xf32> to vector<1x1x1xf32>
    %111 = vector.extract %110[0, 0, 0] : f32 from vector<1x1x1xf32>
    %cst_81 = arith.constant 0.000000e+00 : f32
    %112 = arith.subf %cst_81, %111 : f32
    %cst_82 = arith.constant 1.250000e-01 : f32
    %113 = arith.mulf %112, %cst_82 : f32
    %cst_83 = arith.constant dense<0.000000e+00> : vector<8x8xf32>
    %114 = tpu.matmul %29, %89, %cst_83 {dimension_numbers = #tpu.dot_dimension_numbers<[1], [1], [0], [0], [0, 0, 1, 0], [], []>} : vector<8x128xf32>, vector<8x128xf32>, vector<8x8xf32> -> vector<8x8xf32>
    %cst_84 = arith.constant 14.2857141 : f32
    %115 = vector.broadcast %cst_84 : f32 to vector<8x8xf32>
    %116 = arith.mulf %114, %115 : vector<8x8xf32>
    %117 = arith.mulf %29, %89 : vector<8x128xf32>
    %cst_85 = arith.constant dense<0.000000e+00> : vector<8xf32>
    %118 = vector.multi_reduction <add>, %117, %cst_85 [1] : vector<8x128xf32> to vector<8xf32>
    %119 = vector.shape_cast %118 : vector<8xf32> to vector<8x1xf32>
    %cst_86 = arith.constant 14.2857141 : f32
    %120 = vector.broadcast %cst_86 : f32 to vector<8x1xf32>
    %121 = arith.mulf %119, %120 : vector<8x1xf32>
    %cst_87 = arith.constant dense<0xFF800000> : vector<8xf32>
    %122 = vector.multi_reduction <maximumf>, %116, %cst_87 [1] : vector<8x8xf32> to vector<8xf32>
    %123 = vector.shape_cast %122 : vector<8xf32> to vector<8x1xf32>
    %124 = vector.broadcast %123 : vector<8x1xf32> to vector<8x8xf32>
    %125 = arith.subf %116, %124 : vector<8x8xf32>
    %126 = math.exp %125 : vector<8x8xf32>
    %cst_88 = arith.constant dense<0.000000e+00> : vector<8xf32>
    %127 = vector.multi_reduction <add>, %126, %cst_88 [1] : vector<8x8xf32> to vector<8xf32>
    %128 = vector.shape_cast %127 : vector<8xf32> to vector<8x1xf32>
    %129 = math.log %128 : vector<8x1xf32>
    %130 = arith.addf %123, %129 : vector<8x1xf32>
    %131 = arith.subf %121, %130 : vector<8x1xf32>
    %132 = vector.shape_cast %131 : vector<8x1xf32> to vector<1x8x1xf32>
    %cst_89 = arith.constant dense<0.000000e+00> : vector<1xf32>
    %133 = vector.multi_reduction <add>, %132, %cst_89 [1, 2] : vector<1x8x1xf32> to vector<1xf32>
    %134 = vector.shape_cast %133 : vector<1xf32> to vector<1x1x1xf32>
    %135 = vector.extract %134[0, 0, 0] : f32 from vector<1x1x1xf32>
    %cst_90 = arith.constant 0.000000e+00 : f32
    %136 = arith.subf %cst_90, %135 : f32
    %cst_91 = arith.constant 1.250000e-01 : f32
    %137 = arith.mulf %136, %cst_91 : f32
    %138 = arith.addf %113, %137 : f32
    %cst_92 = arith.constant dense<0.000000e+00> : vector<8x8xf32>
    %139 = tpu.matmul %59, %89, %cst_92 {dimension_numbers = #tpu.dot_dimension_numbers<[1], [1], [0], [0], [0, 0, 1, 0], [], []>} : vector<8x128xf32>, vector<8x128xf32>, vector<8x8xf32> -> vector<8x8xf32>
    %cst_93 = arith.constant 14.2857141 : f32
    %140 = vector.broadcast %cst_93 : f32 to vector<8x8xf32>
    %141 = arith.mulf %139, %140 : vector<8x8xf32>
    %142 = arith.mulf %59, %89 : vector<8x128xf32>
    %cst_94 = arith.constant dense<0.000000e+00> : vector<8xf32>
    %143 = vector.multi_reduction <add>, %142, %cst_94 [1] : vector<8x128xf32> to vector<8xf32>
    %144 = vector.shape_cast %143 : vector<8xf32> to vector<8x1xf32>
    %cst_95 = arith.constant 14.2857141 : f32
    %145 = vector.broadcast %cst_95 : f32 to vector<8x1xf32>
    %146 = arith.mulf %144, %145 : vector<8x1xf32>
    %cst_96 = arith.constant dense<0xFF800000> : vector<8xf32>
    %147 = vector.multi_reduction <maximumf>, %141, %cst_96 [1] : vector<8x8xf32> to vector<8xf32>
    %148 = vector.shape_cast %147 : vector<8xf32> to vector<8x1xf32>
    %149 = vector.broadcast %148 : vector<8x1xf32> to vector<8x8xf32>
    %150 = arith.subf %141, %149 : vector<8x8xf32>
    %151 = math.exp %150 : vector<8x8xf32>
    %cst_97 = arith.constant dense<0.000000e+00> : vector<8xf32>
    %152 = vector.multi_reduction <add>, %151, %cst_97 [1] : vector<8x8xf32> to vector<8xf32>
    %153 = vector.shape_cast %152 : vector<8xf32> to vector<8x1xf32>
    %154 = math.log %153 : vector<8x1xf32>
    %155 = arith.addf %148, %154 : vector<8x1xf32>
    %156 = arith.subf %146, %155 : vector<8x1xf32>
    %157 = vector.shape_cast %156 : vector<8x1xf32> to vector<1x8x1xf32>
    %cst_98 = arith.constant dense<0.000000e+00> : vector<1xf32>
    %158 = vector.multi_reduction <add>, %157, %cst_98 [1, 2] : vector<1x8x1xf32> to vector<1xf32>
    %159 = vector.shape_cast %158 : vector<1xf32> to vector<1x1x1xf32>
    %160 = vector.extract %159[0, 0, 0] : f32 from vector<1x1x1xf32>
    %cst_99 = arith.constant 0.000000e+00 : f32
    %161 = arith.subf %cst_99, %160 : f32
    %cst_100 = arith.constant 1.250000e-01 : f32
    %162 = arith.mulf %161, %cst_100 : f32
    %163 = arith.addf %138, %162 : f32
    %cst_101 = arith.constant 1.000000e-01 : f32
    %164 = arith.mulf %163, %cst_101 : f32
    %165 = math.tanh %164 : f32
    %cst_102 = arith.constant 0.000000e+00 : f32
    %166 = vector.broadcast %cst_102 : f32 to vector<8x128xf32>
    %167 = vector.broadcast %165 : f32 to vector<8x128xf32>
    %168 = arith.addf %166, %167 : vector<8x128xf32>
    %169 = tpu.concatenate %29, %59, %89, %168 in 1 : vector<8x128xf32>, vector<8x128xf32>, vector<8x128xf32>, vector<8x128xf32> -> vector<8x512xf32>
    %c0_103 = arith.constant 0 : index
    %c0_104 = arith.constant 0 : index
    %170 = vector.load %arg2[%c0_103, %c0_104] : memref<8x512xf32, #tpu.memory_space<vmem>>, vector<8x512xf32>
    tpu.vector_store %arg2[%c0_103, %c0_104], %169 {strides = array<i32>} : memref<8x512xf32, #tpu.memory_space<vmem>>, vector<8x512xf32>,
    return
  }
}

</mosaic_0001>

<llo_original>
// kernel: contrastive_forward.1
$region0: #{contrastive_forward.1}
  #allocation0 [shape = 'u32[]', space=smem, size = 0x4, offset = 0x4, fixed_abs, tag = 'smem constant byte address 0x4 - core index']
  #allocation1 [shape = 'u32[72,128]{1,0:T(1,128)}', space=vmem, size = 0x9000, scoped, tag = 'internal scratch']
  %s0 = inlined_call_operand.vmem [shape: f32[3,8,128], index: 0, kind: input, shape index: {}]
  %s1 = inlined_call_operand.hbm [shape: f32[3,272,128], index: 1, kind: input, shape index: {}]
  %s2 = inlined_call_operand.vmem [shape: f32[8,512], index: 2, kind: output, shape index: {}]
  %s3 = sld [smem:[#allocation0]]
  $region22: #{contrastive_forward.1} parent=0
    _
  %s5 = ssub.s32 1, %s3
  %s6 = scalar_select 0, %s5, %s3
  $region1: #{contrastive_forward.1} parent=0
    #allocation2 [shape = 'u8[417792]{0}', space=vmem, size = 0x66000, scoped, tag = 'input window, operand 1, single buffered']
    #allocation3 [shape = 's32[1]{0}', space=sflag, size = 0x4, scoped, tag = 'scoped memory for contrastive_forward.1']
    %7 = vsyncpa [#allocation3], 0
    // Predicated region
    $region2: #{contrastive_forward.1} parent=1 // pred_check
      _
    $region3: #{contrastive_forward.1} parent=1 // pred_check_branch
      %9 = sbr.rel (0) target = $region5
    $region4: #{contrastive_forward.1} parent=1 // pred_region
      _
    $region5: #{contrastive_forward.1} parent=1 // pred_fallthru
      _
    // Predicated region
    $region6: #{contrastive_forward.1} parent=1 // pred_check
      _
    $region7: #{contrastive_forward.1} parent=1 // pred_check_branch
      %11 = sbr.rel (0) target = $region9
    $region8: #{contrastive_forward.1} parent=1 // pred_region
      %13 = vsyncadd [#allocation3], 0
      %s14 = sshll.u32 %s1, 4
      %s15 = int_to_ptr.hbm [resolvable:$true] %s14
      %s16 = sshll.u32 [#allocation2], 4
      %s17 = int_to_ptr.vmem [resolvable:$true] %s16
      %22 = dma.hbm_to_vmem [thread:$0]  %s15, 13056, %s17, [#allocation3], 128, 128, 8
    $region9: #{contrastive_forward.1} parent=1 // pred_fallthru
      _
    // Predicated region
    $region10: #{contrastive_forward.1} parent=1 // pred_check
      _
    $region11: #{contrastive_forward.1} parent=1 // pred_check_branch
      %24 = sbr.rel (0) target = $region13
    $region12: #{contrastive_forward.1} parent=1 // pred_region
      %26 = dma.done [#allocation3], 13056
    $region13: #{contrastive_forward.1} parent=1 // pred_fallthru
      _
    %v27 = vld [vmem:[%s0] sm:$0xff]
    %v28 = vld [vmem:[#allocation2] sm:$0xff]
    %v29 = vld [vmem:[#allocation2 + $0x8] sm:$0xff]
    %v30 = vld [vmem:[#allocation2 + $0x10] sm:$0xff]
    %v31 = vld [vmem:[#allocation2 + $0x18] sm:$0xff]
    %v32 = vld [vmem:[#allocation2 + $0x20] sm:$0xff]
    %v33 = vld [vmem:[#allocation2 + $0x28] sm:$0xff]
    %v34 = vld [vmem:[#allocation2 + $0x30] sm:$0xff]
    %v35 = vld [vmem:[#allocation2 + $0x38] sm:$0xff]
    %v36 = vld [vmem:[#allocation2 + $0x40] sm:$0xff]
    %v37 = vld [vmem:[#allocation2 + $0x48] sm:$0xff]
    %v38 = vld [vmem:[#allocation2 + $0x50] sm:$0xff]
    %v39 = vld [vmem:[#allocation2 + $0x58] sm:$0xff]
    %v40 = vld [vmem:[#allocation2 + $0x60] sm:$0xff]
    %v41 = vld [vmem:[#allocation2 + $0x68] sm:$0xff]
    %v42 = vld [vmem:[#allocation2 + $0x70] sm:$0xff]
    %v43 = vld [vmem:[#allocation2 + $0x78] sm:$0xff]
    %v44 = vld [vmem:[#allocation2 + $0x80] sm:$0xff]
    %v45 = vld [vmem:[#allocation2 + $0x88] sm:$0xff]
    %v46 = vld [vmem:[#allocation2 + $0x90] sm:$0xff]
    %v47 = vld [vmem:[#allocation2 + $0x98] sm:$0xff]
    %v48 = vld [vmem:[#allocation2 + $0xa0] sm:$0xff]
    %v49 = vld [vmem:[#allocation2 + $0xa8] sm:$0xff]
    %v50 = vld [vmem:[#allocation2 + $0xb0] sm:$0xff]
    %v51 = vld [vmem:[#allocation2 + $0xb8] sm:$0xff]
    %v52 = vld [vmem:[#allocation2 + $0xc0] sm:$0xff]
    %v53 = vld [vmem:[#allocation2 + $0xc8] sm:$0xff]
    %v54 = vld [vmem:[#allocation2 + $0xd0] sm:$0xff]
    %v55 = vld [vmem:[#allocation2 + $0xd8] sm:$0xff]
    %v56 = vld [vmem:[#allocation2 + $0xe0] sm:$0xff]
    %v57 = vld [vmem:[#allocation2 + $0xe8] sm:$0xff]
    %v58 = vld [vmem:[#allocation2 + $0xf0] sm:$0xff]
    %v59 = vld [vmem:[#allocation2 + $0xf8] sm:$0xff]
    %v60 = vld [vmem:[#allocation2 + $0x100] sm:$0x1]
    %v61 = vld [vmem:[#allocation2 + $0x108] sm:$0x1]
    %v62 = vperm.slane %v60, 0
    %63 = vmatpush.msra.mxu0 %v43
    %64 = vmatpush.msra.mxu0 %v42
    %65 = vmatpush.msra.mxu0 %v41
    %66 = vmatpush.msra.mxu0 %v40
    %67 = vmatpush.msra.mxu0 %v39
    %68 = vmatpush.msra.mxu0 %v38
    %69 = vmatpush.msra.mxu0 %v37
    %70 = vmatpush.msra.mxu0 %v36
    %71 = vmatpush.msra.mxu0 %v35
    %72 = vmatpush.msra.mxu0 %v34
    %73 = vmatpush.msra.mxu0 %v33
    %74 = vmatpush.msra.mxu0 %v32
    %75 = vmatpush.msra.mxu0 %v31
    %76 = vmatpush.msra.mxu0 %v30
    %77 = vmatpush.msra.mxu0 %v29
    %78 = vmatpush.msra.mxu0 %v28
    %79 = vmatmul.f32.gmra.mxu0 %v27
    %v80 = vpop.f32.mrf.mxu0
    %v81 = vadd.f32 %v62, %v80
    %82 = vdwg.mxu0
    %v83 = vmax.f32 %v81, 0.0
    %v84 = vperm.slane %v61, 0
    %85 = vmatpush.msra.mxu0 %v59
    %86 = vmatpush.msra.mxu0 %v58
    %87 = vmatpush.msra.mxu0 %v57
    %88 = vmatpush.msra.mxu0 %v56
    %89 = vmatpush.msra.mxu0 %v55
    %90 = vmatpush.msra.mxu0 %v54
    %91 = vmatpush.msra.mxu0 %v53
    %92 = vmatpush.msra.mxu0 %v52
    %93 = vmatpush.msra.mxu0 %v51
    %94 = vmatpush.msra.mxu0 %v50
    %95 = vmatpush.msra.mxu0 %v49
    %96 = vmatpush.msra.mxu0 %v48
    %97 = vmatpush.msra.mxu0 %v47
    %98 = vmatpush.msra.mxu0 %v46
    %99 = vmatpush.msra.mxu0 %v45
    %100 = vmatpush.msra.mxu0 %v44
    %101 = vmatmul.f32.gmra.mxu0 %v83
    %v102 = vpop.f32.mrf.mxu0
    %v103 = vadd.f32 %v84, %v102
    %104 = vdwg.mxu0
    %v105 = vmul.f32 %v103, %v103
    %106 = vadd.xlane.f32.xlu0 %v105
    %v107 = vpop.xlane.xlu0 %106
    %v108 = vmax.f32 %v107, 1e-24
    %v109 = vrsqrt.pop %v108
    %v110 = vmul.f32 %v109, %v108
    %v111 = vmul.f32 %v110, %v109
    %v112 = vmul.f32 0.5, %v111
    %v113 = vsub.f32 1.5, %v112
    %v114 = vmul.f32 %v109, %v113
    %vm115 = vweird.f32 %v108
    %vm116 = vweird.f32 %v109
    %vm117 = vmor %vm115, %vm116
    %v118 = vsel %vm117, %v109, %v114
    %v119 = vmul.f32 %v103, %v118
    %s120 = scalar_lea.vmem %s0, 8
    %v121 = vld [vmem:[%s120] sm:$0xff]
    %s122 = scalar_lea.vmem [#allocation2], 272
    %v123 = vld [vmem:[%s122] sm:$0xff]
    %v124 = vld [vmem:[%s122 + $0x8] sm:$0xff]
    %v125 = vld [vmem:[%s122 + $0x10] sm:$0xff]
    %v126 = vld [vmem:[%s122 + $0x18] sm:$0xff]
    %v127 = vld [vmem:[%s122 + $0x20] sm:$0xff]
    %v128 = vld [vmem:[%s122 + $0x28] sm:$0xff]
    %v129 = vld [vmem:[%s122 + $0x30] sm:$0xff]
    %v130 = vld [vmem:[%s122 + $0x38] sm:$0xff]
    %v131 = vld [vmem:[%s122 + $0x40] sm:$0xff]
    %v132 = vld [vmem:[%s122 + $0x48] sm:$0xff]
    %v133 = vld [vmem:[%s122 + $0x50] sm:$0xff]
    %v134 = vld [vmem:[%s122 + $0x58] sm:$0xff]
    %v135 = vld [vmem:[%s122 + $0x60] sm:$0xff]
    %v136 = vld [vmem:[%s122 + $0x68] sm:$0xff]
    %v137 = vld [vmem:[%s122 + $0x70] sm:$0xff]
    %v138 = vld [vmem:[%s122 + $0x78] sm:$0xff]
    %v139 = vld [vmem:[%s122 + $0x80] sm:$0xff]
    %v140 = vld [vmem:[%s122 + $0x88] sm:$0xff]
    %v141 = vld [vmem:[%s122 + $0x90] sm:$0xff]
    %v142 = vld [vmem:[%s122 + $0x98] sm:$0xff]
    %v143 = vld [vmem:[%s122 + $0xa0] sm:$0xff]
    %v144 = vld [vmem:[%s122 + $0xa8] sm:$0xff]
    %v145 = vld [vmem:[%s122 + $0xb0] sm:$0xff]
    %v146 = vld [vmem:[%s122 + $0xb8] sm:$0xff]
    %v147 = vld [vmem:[%s122 + $0xc0] sm:$0xff]
    %v148 = vld [vmem:[%s122 + $0xc8] sm:$0xff]
    %v149 = vld [vmem:[%s122 + $0xd0] sm:$0xff]
    %v150 = vld [vmem:[%s122 + $0xd8] sm:$0xff]
    %v151 = vld [vmem:[%s122 + $0xe0] sm:$0xff]
    %v152 = vld [vmem:[%s122 + $0xe8] sm:$0xff]
    %v153 = vld [vmem:[%s122 + $0xf0] sm:$0xff]
    %v154 = vld [vmem:[%s122 + $0xf8] sm:$0xff]
    %v155 = vld [vmem:[%s122 + $0x100] sm:$0x1]
    %v156 = vld [vmem:[%s122 + $0x108] sm:$0x1]
    %v157 = vperm.slane %v155, 0
    %158 = vmatpush.msra.mxu0 %v138
    %159 = vmatpush.msra.mxu0 %v137
    %160 = vmatpush.msra.mxu0 %v136
    %161 = vmatpush.msra.mxu0 %v135
    %162 = vmatpush.msra.mxu0 %v134
    %163 = vmatpush.msra.mxu0 %v133
    %164 = vmatpush.msra.mxu0 %v132
    %165 = vmatpush.msra.mxu0 %v131
    %166 = vmatpush.msra.mxu0 %v130
    %167 = vmatpush.msra.mxu0 %v129
    %168 = vmatpush.msra.mxu0 %v128
    %169 = vmatpush.msra.mxu0 %v127
    %170 = vmatpush.msra.mxu0 %v126
    %171 = vmatpush.msra.mxu0 %v125
    %172 = vmatpush.msra.mxu0 %v124
    %173 = vmatpush.msra.mxu0 %v123
    %174 = vmatmul.f32.gmra.mxu0 %v121
    %v175 = vpop.f32.mrf.mxu0
    %v176 = vadd.f32 %v157, %v175
    %177 = vdwg.mxu0
    %v178 = vmax.f32 %v176, 0.0
    %v179 = vperm.slane %v156, 0
    %180 = vmatpush.msra.mxu0 %v154
    %181 = vmatpush.msra.mxu0 %v153
    %182 = vmatpush.msra.mxu0 %v152
    %183 = vmatpush.msra.mxu0 %v151
    %184 = vmatpush.msra.mxu0 %v150
    %185 = vmatpush.msra.mxu0 %v149
    %186 = vmatpush.msra.mxu0 %v148
    %187 = vmatpush.msra.mxu0 %v147
    %188 = vmatpush.msra.mxu0 %v146
    %189 = vmatpush.msra.mxu0 %v145
    %190 = vmatpush.msra.mxu0 %v144
    %191 = vmatpush.msra.mxu0 %v143
    %192 = vmatpush.msra.mxu0 %v142
    %193 = vmatpush.msra.mxu0 %v141
    %194 = vmatpush.msra.mxu0 %v140
    %195 = vmatpush.msra.mxu0 %v139
    %196 = vmatmul.f32.gmra.mxu0 %v178
    %v197 = vpop.f32.mrf.mxu0
    %v198 = vadd.f32 %v179, %v197
    %199 = vdwg.mxu0
    %v200 = vmul.f32 %v198, %v198
    %201 = vadd.xlane.f32.xlu0 %v200
    %v202 = vpop.xlane.xlu0 %201
    %v203 = vmax.f32 %v202, 1e-24
    %v204 = vrsqrt.pop %v203
    %v205 = vmul.f32 %v204, %v203
    %v206 = vmul.f32 %v205, %v204
    %v207 = vmul.f32 0.5, %v206
    %v208 = vsub.f32 1.5, %v207
    %v209 = vmul.f32 %v204, %v208
    %vm210 = vweird.f32 %v203
    %vm211 = vweird.f32 %v204
    %vm212 = vmor %vm210, %vm211
    %v213 = vsel %vm212, %v204, %v209
    %v214 = vmul.f32 %v198, %v213
    %s215 = scalar_lea.vmem %s0, 16
    %v216 = vld [vmem:[%s215] sm:$0xff]
    %s217 = scalar_lea.vmem [#allocation2], 544
    %v218 = vld [vmem:[%s217] sm:$0xff]
    %v219 = vld [vmem:[%s217 + $0x8] sm:$0xff]
    %v220 = vld [vmem:[%s217 + $0x10] sm:$0xff]
    %v221 = vld [vmem:[%s217 + $0x18] sm:$0xff]
    %v222 = vld [vmem:[%s217 + $0x20] sm:$0xff]
    %v223 = vld [vmem:[%s217 + $0x28] sm:$0xff]
    %v224 = vld [vmem:[%s217 + $0x30] sm:$0xff]
    %v225 = vld [vmem:[%s217 + $0x38] sm:$0xff]
    %v226 = vld [vmem:[%s217 + $0x40] sm:$0xff]
    %v227 = vld [vmem:[%s217 + $0x48] sm:$0xff]
    %v228 = vld [vmem:[%s217 + $0x50] sm:$0xff]
    %v229 = vld [vmem:[%s217 + $0x58] sm:$0xff]
    %v230 = vld [vmem:[%s217 + $0x60] sm:$0xff]
    %v231 = vld [vmem:[%s217 + $0x68] sm:$0xff]
    %v232 = vld [vmem:[%s217 + $0x70] sm:$0xff]
    %v233 = vld [vmem:[%s217 + $0x78] sm:$0xff]
    %v234 = vld [vmem:[%s217 + $0x80] sm:$0xff]
    %v235 = vld [vmem:[%s217 + $0x88] sm:$0xff]
    %v236 = vld [vmem:[%s217 + $0x90] sm:$0xff]
    %v237 = vld [vmem:[%s217 + $0x98] sm:$0xff]
    %v238 = vld [vmem:[%s217 + $0xa0] sm:$0xff]
    %v239 = vld [vmem:[%s217 + $0xa8] sm:$0xff]
    %v240 = vld [vmem:[%s217 + $0xb0] sm:$0xff]
    %v241 = vld [vmem:[%s217 + $0xb8] sm:$0xff]
    %v242 = vld [vmem:[%s217 + $0xc0] sm:$0xff]
    %v243 = vld [vmem:[%s217 + $0xc8] sm:$0xff]
    %v244 = vld [vmem:[%s217 + $0xd0] sm:$0xff]
    %v245 = vld [vmem:[%s217 + $0xd8] sm:$0xff]
    %v246 = vld [vmem:[%s217 + $0xe0] sm:$0xff]
    %v247 = vld [vmem:[%s217 + $0xe8] sm:$0xff]
    %v248 = vld [vmem:[%s217 + $0xf0] sm:$0xff]
    %v249 = vld [vmem:[%s217 + $0xf8] sm:$0xff]
    %v250 = vld [vmem:[%s217 + $0x100] sm:$0x1]
    %v251 = vld [vmem:[%s217 + $0x108] sm:$0x1]
    %v252 = vperm.slane %v250, 0
    %253 = vmatpush.msra.mxu0 %v233
    %254 = vmatpush.msra.mxu0 %v232
    %255 = vmatpush.msra.mxu0 %v231
    %256 = vmatpush.msra.mxu0 %v230
    %257 = vmatpush.msra.mxu0 %v229
    %258 = vmatpush.msra.mxu0 %v228
    %259 = vmatpush.msra.mxu0 %v227
    %260 = vmatpush.msra.mxu0 %v226
    %261 = vmatpush.msra.mxu0 %v225
    %262 = vmatpush.msra.mxu0 %v224
    %263 = vmatpush.msra.mxu0 %v223
    %264 = vmatpush.msra.mxu0 %v222
    %265 = vmatpush.msra.mxu0 %v221
    %266 = vmatpush.msra.mxu0 %v220
    %267 = vmatpush.msra.mxu0 %v219
    %268 = vmatpush.msra.mxu0 %v218
    %269 = vmatmul.f32.gmra.mxu0 %v216
    %v270 = vpop.f32.mrf.mxu0
    %v271 = vadd.f32 %v252, %v270
    %272 = vdwg.mxu0
    %v273 = vmax.f32 %v271, 0.0
    %v274 = vperm.slane %v251, 0
    %275 = vmatpush.msra.mxu0 %v249
    %276 = vmatpush.msra.mxu0 %v248
    %277 = vmatpush.msra.mxu0 %v247
    %278 = vmatpush.msra.mxu0 %v246
    %279 = vmatpush.msra.mxu0 %v245
    %280 = vmatpush.msra.mxu0 %v244
    %281 = vmatpush.msra.mxu0 %v243
    %282 = vmatpush.msra.mxu0 %v242
    %283 = vmatpush.msra.mxu0 %v241
    %284 = vmatpush.msra.mxu0 %v240
    %285 = vmatpush.msra.mxu0 %v239
    %286 = vmatpush.msra.mxu0 %v238
    %287 = vmatpush.msra.mxu0 %v237
    %288 = vmatpush.msra.mxu0 %v236
    %289 = vmatpush.msra.mxu0 %v235
    %290 = vmatpush.msra.mxu0 %v234
    %291 = vmatmul.f32.gmra.mxu0 %v273
    %v292 = vpop.f32.mrf.mxu0
    %v293 = vadd.f32 %v274, %v292
    %294 = vdwg.mxu0
    %v295 = vmul.f32 %v293, %v293
    %296 = vadd.xlane.f32.xlu0 %v295
    %v297 = vpop.xlane.xlu0 %296
    %v298 = vmax.f32 %v297, 1e-24
    %v299 = vrsqrt.pop %v298
    %v300 = vmul.f32 %v299, %v298
    %v301 = vmul.f32 %v300, %v299
    %v302 = vmul.f32 0.5, %v301
    %v303 = vsub.f32 1.5, %v302
    %v304 = vmul.f32 %v299, %v303
    %vm305 = vweird.f32 %v298
    %vm306 = vweird.f32 %v299
    %vm307 = vmor %vm305, %vm306
    %v308 = vsel %vm307, %v299, %v304
    %v309 = vmul.f32 %v293, %v308
    %310 = vmatpush.xpose.msra.mxu0 0.0
    %311 = vmatpush.xpose.msra.mxu0 0.0
    %312 = vmatpush.xpose.msra.mxu0 0.0
    %313 = vmatpush.xpose.msra.mxu0 0.0
    %314 = vmatpush.xpose.msra.mxu0 0.0
    %315 = vmatpush.xpose.msra.mxu0 0.0
    %316 = vmatpush.xpose.msra.mxu0 0.0
    %317 = vmatpush.xpose.msra.mxu0 0.0
    %318 = vmatpush.xpose.msra.mxu0 0.0
    %319 = vmatpush.xpose.msra.mxu0 0.0
    %320 = vmatpush.xpose.msra.mxu0 0.0
    %321 = vmatpush.xpose.msra.mxu0 0.0
    %322 = vmatpush.xpose.msra.mxu0 0.0
    %323 = vmatpush.xpose.msra.mxu0 0.0
    %324 = vmatpush.xpose.msra.mxu0 0.0
    %325 = vmatpush.xpose.msra.mxu0 %v214
    %326 = vmatmul.f32.gmra.mxu0 %v119
    %v327 = vpop.f32.mrf.mxu0
    %v328 = vadd.f32 0.0, %v327
    %329 = vdwg.mxu0
    %v330 = vmul.f32 %v328, 14.285714
    %v331 = vmul.f32 %v119, %v214
    %332 = vadd.xlane.f32.xlu0 %v331
    %v333 = vpop.xlane.xlu0 %332
    %v334 = vmul.f32 %v333, 14.285714
    %vm335 = vcmask 64512
    %v336 = vsel %vm335, %v330, -inf
    %337 = vmax.xlane.f32.xlu0 %v336
    %v338 = vpop.xlane.xlu0 %337
    %v339 = vsub.f32 %v330, %v338
    %v340 = vmul.f32 %v339, 1.442695
    %v341 = vpow.pop %v340
    %v342 = vsel %vm335, %v341, 0.0
    %343 = vadd.xlane.f32.xlu0 %v342
    %v344 = vpop.xlane.xlu0 %343
    %v345 = vlog2.pop %v344
    %v346 = vmul.f32 %v345, 0.6931472
    %v347 = vadd.f32 %v338, %v346
    %v348 = vsub.f32 %v334, %v347
    %vm349 = vcmask 7168
    %v350 = vsel %vm349, %v348, 0.0
    %351 = vadd.xlane.f32.xlu0 %v350
    %v352 = vpop.xlane.xlu0 %351
    %v353 = vrot.slane %v352, 4
    %v354 = vadd.f32 %v352, %v353
    %v355 = vrot.slane %v354, 2
    %v356 = vadd.f32 %v354, %v355
    %v357 = vrot.slane %v356, 1
    %v358 = vadd.f32 %v356, %v357
    %s359 = vtos %v358
    %s360 = ssub.f32 0.0, %s359
    %s361 = smul.f32 %s360, 0.125
    %362 = vmatpush.xpose.msra.mxu0 0.0
    %363 = vmatpush.xpose.msra.mxu0 0.0
    %364 = vmatpush.xpose.msra.mxu0 0.0
    %365 = vmatpush.xpose.msra.mxu0 0.0
    %366 = vmatpush.xpose.msra.mxu0 0.0
    %367 = vmatpush.xpose.msra.mxu0 0.0
    %368 = vmatpush.xpose.msra.mxu0 0.0
    %369 = vmatpush.xpose.msra.mxu0 0.0
    %370 = vmatpush.xpose.msra.mxu0 0.0
    %371 = vmatpush.xpose.msra.mxu0 0.0
    %372 = vmatpush.xpose.msra.mxu0 0.0
    %373 = vmatpush.xpose.msra.mxu0 0.0
    %374 = vmatpush.xpose.msra.mxu0 0.0
    %375 = vmatpush.xpose.msra.mxu0 0.0
    %376 = vmatpush.xpose.msra.mxu0 0.0
    %377 = vmatpush.xpose.msra.mxu0 %v309
    %378 = vmatmul.f32.gmra.mxu0 %v119
    %v379 = vpop.f32.mrf.mxu0
    %v380 = vadd.f32 0.0, %v379
    %381 = vdwg.mxu0
    %v382 = vmul.f32 %v380, 14.285714
    %v383 = vmul.f32 %v119, %v309
    %384 = vadd.xlane.f32.xlu0 %v383
    %v385 = vpop.xlane.xlu0 %384
    %v386 = vmul.f32 %v385, 14.285714
    %v387 = vsel %vm335, %v382, -inf
    %388 = vmax.xlane.f32.xlu0 %v387
    %v389 = vpop.xlane.xlu0 %388
    %v390 = vsub.f32 %v382, %v389
    %v391 = vmul.f32 %v390, 1.442695
    %v392 = vpow.pop %v391
    %v393 = vsel %vm335, %v392, 0.0
    %394 = vadd.xlane.f32.xlu0 %v393
    %v395 = vpop.xlane.xlu0 %394
    %v396 = vlog2.pop %v395
    %v397 = vmul.f32 %v396, 0.6931472
    %v398 = vadd.f32 %v389, %v397
    %v399 = vsub.f32 %v386, %v398
    %v400 = vsel %vm349, %v399, 0.0
    %401 = vadd.xlane.f32.xlu0 %v400
    %v402 = vpop.xlane.xlu0 %401
    %v403 = vrot.slane %v402, 4
    %v404 = vadd.f32 %v402, %v403
    %v405 = vrot.slane %v404, 2
    %v406 = vadd.f32 %v404, %v405
    %v407 = vrot.slane %v406, 1
    %v408 = vadd.f32 %v406, %v407
    %s409 = vtos %v408
    %s410 = ssub.f32 0.0, %s409
    %s411 = smul.f32 %s410, 0.125
    %s412 = sadd.f32 %s361, %s411
    %413 = vmatpush.xpose.msra.mxu0 0.0
    %414 = vmatpush.xpose.msra.mxu0 0.0
    %415 = vmatpush.xpose.msra.mxu0 0.0
    %416 = vmatpush.xpose.msra.mxu0 0.0
    %417 = vmatpush.xpose.msra.mxu0 0.0
    %418 = vmatpush.xpose.msra.mxu0 0.0
    %419 = vmatpush.xpose.msra.mxu0 0.0
    %420 = vmatpush.xpose.msra.mxu0 0.0
    %421 = vmatpush.xpose.msra.mxu0 0.0
    %422 = vmatpush.xpose.msra.mxu0 0.0
    %423 = vmatpush.xpose.msra.mxu0 0.0
    %424 = vmatpush.xpose.msra.mxu0 0.0
    %425 = vmatpush.xpose.msra.mxu0 0.0
    %426 = vmatpush.xpose.msra.mxu0 0.0
    %427 = vmatpush.xpose.msra.mxu0 0.0
    %428 = vmatpush.xpose.msra.mxu0 %v309
    %429 = vmatmul.f32.gmra.mxu0 %v214
    %v430 = vpop.f32.mrf.mxu0
    %v431 = vadd.f32 0.0, %v430
    %432 = vdwg.mxu0
    %v433 = vmul.f32 %v431, 14.285714
    %v434 = vmul.f32 %v214, %v309
    %435 = vadd.xlane.f32.xlu0 %v434
    %v436 = vpop.xlane.xlu0 %435
    %v437 = vmul.f32 %v436, 14.285714
    %v438 = vsel %vm335, %v433, -inf
    %439 = vmax.xlane.f32.xlu0 %v438
    %v440 = vpop.xlane.xlu0 %439
    %v441 = vsub.f32 %v433, %v440
    %v442 = vmul.f32 %v441, 1.442695
    %v443 = vpow.pop %v442
    %v444 = vsel %vm335, %v443, 0.0
    %445 = vadd.xlane.f32.xlu0 %v444
    %v446 = vpop.xlane.xlu0 %445
    %v447 = vlog2.pop %v446
    %v448 = vmul.f32 %v447, 0.6931472
    %v449 = vadd.f32 %v440, %v448
    %v450 = vsub.f32 %v437, %v449
    %v451 = vsel %vm349, %v450, 0.0
    %452 = vadd.xlane.f32.xlu0 %v451
    %v453 = vpop.xlane.xlu0 %452
    %v454 = vrot.slane %v453, 4
    %v455 = vadd.f32 %v453, %v454
    %v456 = vrot.slane %v455, 2
    %v457 = vadd.f32 %v455, %v456
    %v458 = vrot.slane %v457, 1
    %v459 = vadd.f32 %v457, %v458
    %s460 = vtos %v459
    %s461 = ssub.f32 0.0, %s460
    %s462 = smul.f32 %s461, 0.125
    %s463 = sadd.f32 %s412, %s462
    %s464 = smul.f32 %s463, 0.1
    %v465 = vstv %s464
    %v466 = vtanh.pop %v465
    %s467 = vtos %v466
    %v468 = vstv %s467
    %v469 = vadd.f32 %v468, 0.0
    %470 = vst [vmem:[%s2] sm:$0xff] %v119
    %471 = vst [vmem:[%s2 + $0x8] sm:$0xff] %v214
    %472 = vst [vmem:[%s2 + $0x10] sm:$0xff] %v309
    %473 = vst [vmem:[%s2 + $0x18] sm:$0xff] %v469
    // Predicated region
    $region14: #{contrastive_forward.1} parent=1 // pred_check
      _
    $region15: #{contrastive_forward.1} parent=1 // pred_check_branch
      %475 = sbr.rel (0) target = $region17
    $region16: #{contrastive_forward.1} parent=1 // pred_region
      _
    $region17: #{contrastive_forward.1} parent=1 // pred_fallthru
      _
    // Predicated region
    $region18: #{contrastive_forward.1} parent=1 // pred_check
      _
    $region19: #{contrastive_forward.1} parent=1 // pred_check_branch
      %477 = sbr.rel (0) target = $region21
    $region20: #{contrastive_forward.1} parent=1 // pred_region
      _
    $region21: #{contrastive_forward.1} parent=1 // pred_fallthru
      _
    %478 = vsyncpa [#allocation3], 1

</llo_original>
